<compile_context>
chip_gen: v5e
topology: v5e:2x2
jax: 0.10.0
libtpu: 0.0.40
codegen_flags: <defaults>
</compile_context>

<pallas_src>
import jax
import jax.numpy as jnp
from jax.experimental import pallas as pl
from jax.experimental.pallas import tpu as pltpu


# ---------------------------------------------------------------------------
# Kernels (I is pre-transposed in the wrapper: it_ref is a (K, tn) tile).
# ---------------------------------------------------------------------------
def _mf_kernel_single(u_ref, it_ref, o_ref):
    """Full-K tiles: one MXU dot per output tile, no accumulator, no pl.when."""
    o_ref[...] = jnp.dot(
        u_ref[...], it_ref[...], preferred_element_type=jnp.float32
    ).astype(o_ref.dtype)


def _mf_kernel_ktiled(u_ref, it_ref, o_ref, acc_ref):
    """K-tiled fallback for very large hidden_dim (reduction axis last)."""
    @pl.when(pl.program_id(2) == 0)
    def _():
        acc_ref[...] = jnp.zeros_like(acc_ref)

    acc_ref[...] += jnp.dot(
        u_ref[...], it_ref[...], preferred_element_type=jnp.float32
    )

    @pl.when(pl.program_id(2) == pl.num_programs(2) - 1)
    def _():
        o_ref[...] = acc_ref[...].astype(o_ref.dtype)


# ---------------------------------------------------------------------------
# Tile selection (VMEM-budgeted, per TPU generation).
# ---------------------------------------------------------------------------
def _round_up(x, m):
    return ((x + m - 1) // m) * m


def _vmem_capacity_bytes():
    """Physical VMEM of the current TPU generation (conservative fallback)."""
    try:
        return int(pltpu.get_tpu_info().vmem_capacity_bytes)
    except Exception:
        return 64 << 20  # v7x per-TensorCore VMEM -- the tightest generation


def _select_config(num_users, num_items, K, in_bytes, out_bytes, budget):
    """Pick (tm, tn, tk, items_outer).  tk == K means single-pass (no K grid axis)."""
    # The larger factor matrix sits on the OUTER grid axis: it is DMA'd from
    # HBM exactly once, while the smaller one is re-streamed per outer block.
    items_outer = num_items >= num_users

    def footprint(tm_, tn_, tk_):
        b = 2 * (tm_ * tk_ + tk_ * tn_) * in_bytes   # double-buffered inputs
        b += 2 * tm_ * tn_ * out_bytes               # double-buffered output
        if tk_ != K:
            b += tm_ * tn_ * 4                       # f32 accumulator scratch
        return b

    # MXU-aligned base tiles (full dim when small -- always a legal block).
    tm = num_users if num_users <= 256 else 256
    tn = num_items if num_items <= 256 else 256

    # Single pass whenever the full contraction dim fits the VMEM budget,
    # otherwise tile K (kept a multiple of 128 for (8,128) layout legality).
    if footprint(tm, tn, K) <= budget:
        tk = K
    else:
        tk = _round_up(min(K, 2048), 128)
        while footprint(tm, tn, tk) > budget and tk > 128:
            tk = _round_up(tk // 2, 128)
        if tk >= K:          # degenerate: a single K block -> just go single-pass
            tk = K

    # Grow the resident (outer) operand's tile: fewer outer blocks means the
    # streamed operand is re-read from HBM fewer times.  Keep >= 2 total blocks
    # so megacore "parallel" sharding has work for both TensorCores (v7x).
    cap = 2048
    if items_outer:
        inner_blocks = pl.cdiv(num_users, tm)
        while (tn + 256 <= min(cap, num_items)
               and footprint(tm, tn + 256, tk) <= budget
               and inner_blocks * pl.cdiv(num_items, tn + 256) >= 2):
            tn += 256
    else:
        inner_blocks = pl.cdiv(num_items, tn)
        while (tm + 256 <= min(cap, num_users)
               and footprint(tm + 256, tn, tk) <= budget
               and inner_blocks * pl.cdiv(num_users, tm + 256) >= 2):
            tm += 256

    return tm, tn, tk, items_outer


# ---------------------------------------------------------------------------
# Forward wrapper:  logit = u @ i.T
# ---------------------------------------------------------------------------
def mf_forward(u, i, *, compute_dtype=jnp.bfloat16, out_dtype=None,
               tm=None, tn=None, tk=None, vmem_budget_bytes=None):
    """MF forward (logit = u @ i.T) as a tiled Pallas TPU matmul.

    compute_dtype: dtype fed to the MXU (default bf16: ~4x MXU throughput and
        half the HBM streaming vs fp32; accumulation is always f32).  Pass
        jnp.float32 (or None) to reproduce the exact fp32 PyTorch numerics.
    out_dtype: logit dtype (default: u.dtype).  Passing bf16 halves the
        dominant output write stream when hidden_dim is small.
    """
    num_users, hidden_dim = u.shape
    num_items, hidden_dim_i = i.shape
    assert hidden_dim == hidden_dim_i, "hidden_dim mismatch between u and i"
    assert u.dtype == i.dtype, "u and i must have the same dtype"

    out_dtype = jnp.dtype(u.dtype if out_dtype is None else out_dtype)
    compute_dtype = jnp.dtype(u.dtype if compute_dtype is None else compute_dtype)
    in_bytes = compute_dtype.itemsize
    out_bytes = out_dtype.itemsize

    capacity = _vmem_capacity_bytes()
    budget = (min(capacity // 2, 96 << 20) if vmem_budget_bytes is None
              else int(vmem_budget_bytes))

    a_tm, a_tn, a_tk, items_outer = _select_config(
        num_users, num_items, hidden_dim, in_bytes, out_bytes, budget)
    tm = a_tm if tm is None else tm
    tn = a_tn if tn is None else tn
    tk = a_tk if tk is None else tk

    # One-time wrapper-side prep (fused by XLA): cast to the MXU compute dtype
    # and transpose I to (hidden, num_items) so every tile dot is [tm,K]x[K,tn].
    u_c = u.astype(compute_dtype)
    i_t = jnp.transpose(i).astype(compute_dtype)

    single_pass = (tk == hidden_dim)
    K = hidden_dim
    if not single_pass and K % tk != 0:
        # Zero-pad the contraction dim so every K block is full (zeros are an
        # exact no-op for the dot).
        K = _round_up(K, tk)
        u_c = jnp.pad(u_c, ((0, 0), (0, K - hidden_dim)))
        i_t = jnp.pad(i_t, ((0, K - hidden_dim), (0, 0)))

    m_blocks = pl.cdiv(num_users, tm)
    n_blocks = pl.cdiv(num_items, tn)

    # Cost hint: the streamed operand really is re-read once per outer block.
    if items_outer:
        u_hbm_bytes = num_users * K * in_bytes * n_blocks
        i_hbm_bytes = num_items * K * in_bytes
    else:
        u_hbm_bytes = num_users * K * in_bytes
        i_hbm_bytes = num_items * K * in_bytes * m_blocks
    cost = pl.CostEstimate(
        flops=2 * num_users * num_items * hidden_dim,
        transcendentals=0,
        bytes_accessed=u_hbm_bytes + i_hbm_bytes
                       + num_users * num_items * out_bytes,
    )

    # Explicit scoped-VMEM limit sized from the double-buffered block footprint.
    tk_blk = K if single_pass else tk
    blk_bytes = (2 * (tm * tk_blk + tk_blk * tn) * in_bytes
                 + 2 * tm * tn * out_bytes
                 + (0 if single_pass else tm * tn * 4))
    vmem_limit = int(min(capacity, max(blk_bytes + (8 << 20), 32 << 20)))

    out_shape = jax.ShapeDtypeStruct((num_users, num_items), out_dtype)

    if single_pass:
        if items_outer:
            grid = (n_blocks, m_blocks)
            u_spec = pl.BlockSpec((tm, K), lambda n, m: (m, 0))
            it_spec = pl.BlockSpec((K, tn), lambda n, m: (0, n))
            o_spec = pl.BlockSpec((tm, tn), lambda n, m: (m, n))
        else:
            grid = (m_blocks, n_blocks)
            u_spec = pl.BlockSpec((tm, K), lambda m, n: (m, 0))
            it_spec = pl.BlockSpec((K, tn), lambda m, n: (0, n))
            o_spec = pl.BlockSpec((tm, tn), lambda m, n: (m, n))
        return pl.pallas_call(
            _mf_kernel_single,
            out_shape=out_shape,
            grid_spec=pltpu.PrefetchScalarGridSpec(
                num_scalar_prefetch=0,
                grid=grid,
                in_specs=[u_spec, it_spec],
                out_specs=o_spec,
            ),
            compiler_params=pltpu.CompilerParams(
                dimension_semantics=("parallel", "parallel"),
                vmem_limit_bytes=vmem_limit,
            ),
            cost_estimate=cost,
        )(u_c, i_t)

    # K-tiled fallback (very large hidden_dim): reduction axis last, "arbitrary".
    k_blocks = K // tk
    if items_outer:
        grid = (n_blocks, m_blocks, k_blocks)
        u_spec = pl.BlockSpec((tm, tk), lambda n, m, k: (m, k))
        it_spec = pl.BlockSpec((tk, tn), lambda n, m, k: (k, n))
        o_spec = pl.BlockSpec((tm, tn), lambda n, m, k: (m, n))
    else:
        grid = (m_blocks, n_blocks, k_blocks)
        u_spec = pl.BlockSpec((tm, tk), lambda m, n, k: (m, k))
        it_spec = pl.BlockSpec((tk, tn), lambda m, n, k: (k, n))
        o_spec = pl.BlockSpec((tm, tn), lambda m, n, k: (m, n))
    return pl.pallas_call(
        _mf_kernel_ktiled,
        out_shape=out_shape,
        grid_spec=pltpu.PrefetchScalarGridSpec(
            num_scalar_prefetch=0,
            grid=grid,
            in_specs=[u_spec, it_spec],
            out_specs=o_spec,
            scratch_shapes=[pltpu.VMEM((tm, tn), jnp.float32)],
        ),
        compiler_params=pltpu.CompilerParams(
            dimension_semantics=("parallel", "parallel", "arbitrary"),
            vmem_limit_bytes=vmem_limit,
        ),
        cost_estimate=cost,
    )(u_c, i_t)


if __name__ == "__main__":
    # Deterministic "parameter init" mirroring torch.randn in MF.__init__.
    # num_items is deliberately NOT a multiple of 256 to exercise cdiv tiling
    # with a masked partial edge block.
    num_users, num_items, hidden_dim = 48, 384, 64
    key = jax.random.PRNGKey(0)
    ku, ki = jax.random.split(key)
    u = jax.random.normal(ku, (num_users, hidden_dim), dtype=jnp.float32)
    i = jax.random.normal(ki, (num_items, hidden_dim), dtype=jnp.float32)
    ref = u @ i.T

    # 1) Exact fp32 path (matches the PyTorch forward numerics).
    logit_f32 = jax.block_until_ready(mf_forward(u, i, compute_dtype=jnp.float32))
    assert logit_f32.shape == (num_users, num_items)
    assert jnp.allclose(logit_f32, ref, atol=1e-3, rtol=1e-3)

    # 2) Default bf16-MXU path (f32 accumulation) -- looser tolerance.
    logit_bf16 = jax.block_until_ready(mf_forward(u, i))
    assert logit_bf16.shape == (num_users, num_items)
    assert logit_bf16.dtype == jnp.float32
    assert jnp.allclose(logit_bf16, ref, atol=0.5, rtol=5e-2)

    # 3) K-tiled fallback (forced via a tiny VMEM budget) with a hidden dim
    #    that is not a multiple of the K tile (exercises the zero-pad path).
    hidden2 = 320
    u2 = jax.random.normal(ku, (num_users, hidden2), dtype=jnp.float32)
    i2 = jax.random.normal(ki, (num_items, hidden2), dtype=jnp.float32)
    ref2 = u2 @ i2.T
    logit_kt = jax.block_until_ready(
        mf_forward(u2, i2, compute_dtype=jnp.float32,
                   vmem_budget_bytes=256 * 1024))
    assert jnp.allclose(logit_kt, ref2, atol=1e-3, rtol=1e-3)

    # implicit=True branch of the reference module is a no-op (`pass`).
    print("KERNEL_OK")
</pallas_src>

<mosaic_0001>
module attributes {stable_mosaic.version = 11 : i64} {
  func.func @_mf_kernel_single(%arg0: i32, %arg1: i32, %arg2: memref<48x64xf32, #tpu.memory_space<vmem>>, %arg3: memref<64x256xf32, #tpu.memory_space<vmem>>, %arg4: memref<48x256xf32, #tpu.memory_space<vmem>>) attributes {dimension_semantics = [#tpu.dimension_semantics<parallel>, #tpu.dimension_semantics<parallel>], iteration_bounds = array<i64: 2, 1>, scalar_prefetch = 0 : i64, scratch_operands = 0 : i64, tpu.core_type = #tpu.core_type<tc>, window_params = [{transform_indices = @transform_0, window_bounds = array<i64: 48, 64>}, {transform_indices = @transform_1, window_bounds = array<i64: 64, 256>}, {transform_indices = @transform_2, window_bounds = array<i64: 48, 256>}]} {
    %c0 = arith.constant 0 : index
    %c0_0 = arith.constant 0 : index
    %0 = vector.load %arg2[%c0, %c0_0] : memref<48x64xf32, #tpu.memory_space<vmem>>, vector<48x64xf32>
    %c0_1 = arith.constant 0 : index
    %c0_2 = arith.constant 0 : index
    %1 = vector.load %arg3[%c0_1, %c0_2] : memref<64x256xf32, #tpu.memory_space<vmem>>, vector<64x256xf32>
    %cst = arith.constant dense<0.000000e+00> : vector<48x256xf32>
    %2 = tpu.matmul %0, %1, %cst {dimension_numbers = #tpu.dot_dimension_numbers<[1], [0], [0], [1], [0, 0, 1, 1], [], []>} : vector<48x64xf32>, vector<64x256xf32>, vector<48x256xf32> -> vector<48x256xf32>
    %c0_3 = arith.constant 0 : index
    %c0_4 = arith.constant 0 : index
    %3 = vector.load %arg4[%c0_3, %c0_4] : memref<48x256xf32, #tpu.memory_space<vmem>>, vector<48x256xf32>
    tpu.vector_store %arg4[%c0_3, %c0_4], %2 {strides = array<i32>} : memref<48x256xf32, #tpu.memory_space<vmem>>, vector<48x256xf32>,
    return
  }
  func.func @transform_0(%arg0: i32, %arg1: i32) -> (i32, i32) {
    %c0_i32 = arith.constant 0 : i32
    %c0_i32_0 = arith.constant 0 : i32
    return %arg1, %c0_i32 : i32, i32
  }
  func.func @transform_1(%arg0: i32, %arg1: i32) -> (i32, i32) {
    %c0_i32 = arith.constant 0 : i32
    %c0_i32_0 = arith.constant 0 : i32
    return %c0_i32, %arg0 : i32, i32
  }
  func.func @transform_2(%arg0: i32, %arg1: i32) -> (i32, i32) {
    %c0_i32 = arith.constant 0 : i32
    return %arg1, %arg0 : i32, i32
  }
}

</mosaic_0001>

<llo_original>
// kernel: tpu_custom_call.1
$region0: #{tpu_custom_call.1}
  #allocation0 [shape = 'u32[]', space=smem, size = 0x4, offset = 0x4, fixed_abs, tag = 'smem constant byte address 0x4 - core index']
  #allocation1 [shape = 'u32[72,128]{1,0:T(1,128)}', space=vmem, size = 0x9000, scoped, tag = 'internal scratch']
  %s0 = inlined_call_operand.hbm [shape: f32[48,64], index: 0, kind: input, shape index: {}]
  %s1 = inlined_call_operand.hbm [shape: f32[64,384], index: 1, kind: input, shape index: {}]
  %s2 = inlined_call_operand.hbm [shape: f32[48,384], index: 2, kind: output, shape index: {}]
  %s3 = sld [smem:[#allocation0]]
  $region49: #{tpu_custom_call.1} parent=0
    _
  %s5 = ssub.s32 1, %s3
  %s6 = scalar_select 0, %s5, %s3
  $region1: #{tpu_custom_call.1} parent=0
    #allocation2 [shape = 'u8[24576]{0}', space=vmem, size = 0x6000, scoped, tag = 'input window, operand 0, single buffered']
    #allocation3 [shape = 's32[2]{0}', space=sflag, size = 0x8, scoped, tag = 'scoped memory for tpu_custom_call.1']
    #allocation4 [shape = 's32[2]{0}', space=sflag, size = 0x8, scoped, tag = 'scoped memory for tpu_custom_call.1']
    #allocation5 [shape = 'u8[131072]{0}', space=vmem, size = 0x20000, scoped, tag = 'input window, operand 1']
    #allocation6 [shape = 's32[2]{0}', space=sflag, size = 0x8, scoped, tag = 'scoped memory for tpu_custom_call.1']
    #allocation7 [shape = 'u8[98304]{0}', space=vmem, size = 0x18000, scoped, tag = 'output window, operand 0']
    %7 = vsyncpa [#allocation3], 0
    %8 = vsyncpa [#allocation6], 0
    %s9 = scalar_lea.sflag [#allocation6], 1
    %10 = vsyncpa %s9, 0
    %11 = vsyncpa [#allocation4], 0
    %s12 = scalar_lea.sflag [#allocation4], 1
    %13 = vsyncpa %s12, 0
    loop: start=0, step=1, limit=4
    $region2: #{tpu_custom_call.1} parent=1 // loop_pre_header
      _
    $region3: #{tpu_custom_call.1} parent=1 // loop_header
      %s15 = sphi 0, %s19
      %p16 = scmp.ge.s32.totalorder %s15, 4
      %s22 = sphi 0, %s34
      %s23 = sphi 0, %s30
      %s24 = sphi 0, %s22
      %s25 = sphi 0, %s23
      %s26 = sphi 0, %s24
      %s27 = sphi 0, %s25
      %s37 = sphi 0, %s39
      %s40 = sphi 0, %s37
      %s41 = sphi 0, %s40
      %s57 = sphi 0, %s41
      %s63 = sphi 0, %s65
      %s66 = sphi 0, %s63
      %s67 = sphi 0, %s66
      %s83 = sphi 0, %s67
      %s91 = sphi 0, %s93
      %s94 = sphi 0, %s91
      %s95 = sphi 0, %s94
      %s111 = sphi 0, %s95
    $region4: #{tpu_custom_call.1} parent=1 // loop_header_branch
      %18 = sbr.rel (%p16) target = $region8
    $region5: #{tpu_custom_call.1} parent=1 // loop_body
      %s20 = ssub.s32 %s15, 1
      %s21 = ssub.s32 %s15, 2
      %s28 = sadd.s32 1, %s23
      %p29 = scmp.ge.s32.totalorder %s28, 1
      %s30 = scalar_select %p29, 0, %s28
      %s31 = sadd.s32 1, %s22
      %s32 = scalar_select %p29, %s31, %s22
      %p33 = scmp.ge.s32.totalorder %s32, 2
      %s34 = scalar_select %p33, 0, %s32
      %s35 = ssub.s32 %s23, %s30
      %p36 = scmp.eq.s32.totalorder %s35, 0
      %s38 = sadd.s32 %s37, 1
      %s39 = scalar_select %p36, %s37, %s38
      %p42 = pneg %p36
      %p43 = scmp.eq.s32.totalorder %s15, 1
      %p44 = por %p42, %p43
      %p45 = scmp.ne.s32.totalorder %s37, %s40
      %p46 = scmp.eq.s32.totalorder %s15, 0
      %p47 = por %p45, %p46
      %p48 = scmp.ne.s32.totalorder %s37, %s40
      %p49 = scmp.eq.s32.totalorder %s20, 1
      %p50 = por %p48, %p49
      %p51 = scmp.ne.s32.totalorder %s40, %s41
      %p52 = scmp.eq.s32.totalorder %s20, 0
      %p53 = por %p51, %p52
      %p54 = scmp.ne.s32.totalorder %s40, %s41
      %p55 = scmp.eq.s32.totalorder %s21, 1
      %p56 = por %p54, %p55
      %p58 = scmp.ne.s32.totalorder %s41, %s57
      %p59 = scmp.eq.s32.totalorder %s21, 0
      %p60 = por %p58, %p59
      %s61 = ssub.s32 %s22, %s34
      %p62 = scmp.eq.s32.totalorder %s61, 0
      %s64 = sadd.s32 %s63, 1
      %s65 = scalar_select %p62, %s63, %s64
      %p68 = pneg %p62
      %p69 = scmp.eq.s32.totalorder %s15, 1
      %p70 = por %p68, %p69
      %p71 = scmp.ne.s32.totalorder %s63, %s66
      %p72 = scmp.eq.s32.totalorder %s15, 0
      %p73 = por %p71, %p72
      %p74 = scmp.ne.s32.totalorder %s63, %s66
      %p75 = scmp.eq.s32.totalorder %s20, 1
      %p76 = por %p74, %p75
      %p77 = scmp.ne.s32.totalorder %s66, %s67
      %p78 = scmp.eq.s32.totalorder %s20, 0
      %p79 = por %p77, %p78
      %p80 = scmp.ne.s32.totalorder %s66, %s67
      %p81 = scmp.eq.s32.totalorder %s21, 1
      %p82 = por %p80, %p81
      %p84 = scmp.ne.s32.totalorder %s67, %s83
      %p85 = scmp.eq.s32.totalorder %s21, 0
      %p86 = por %p84, %p85
      %s87 = ssub.s32 %s23, %s30
      %s88 = ssub.s32 %s22, %s34
      %s89 = sor.u32 %s87, %s88
      %p90 = scmp.eq.s32.totalorder %s89, 0
      %s92 = sadd.s32 %s91, 1
      %s93 = scalar_select %p90, %s91, %s92
      %p96 = pneg %p90
      %p97 = scmp.eq.s32.totalorder %s15, 1
      %p98 = por %p96, %p97
      %p99 = scmp.ne.s32.totalorder %s91, %s94
      %p100 = scmp.eq.s32.totalorder %s15, 0
      %p101 = por %p99, %p100
      %p102 = scmp.ne.s32.totalorder %s91, %s94
      %p103 = scmp.eq.s32.totalorder %s20, 1
      %p104 = por %p102, %p103
      %p105 = scmp.ne.s32.totalorder %s94, %s95
      %p106 = scmp.eq.s32.totalorder %s20, 0
      %p107 = por %p105, %p106
      %p108 = scmp.ne.s32.totalorder %s94, %s95
      %p109 = scmp.eq.s32.totalorder %s21, 1
      %p110 = por %p108, %p109
      %p112 = scmp.ne.s32.totalorder %s95, %s111
      %p113 = scmp.eq.s32.totalorder %s21, 0
      %p114 = por %p112, %p113
      %p115 = scmp.le.s32.totalorder 1, %s15
      %p116 = scmp.lt.s32.totalorder %s15, 3
      %p117 = pnand %p115, %p116
      %p118 = pneg %p117
      // Predicated region
      $region9: #{tpu_custom_call.1} parent=5 // pred_check
        _
      $region10: #{tpu_custom_call.1} parent=5 // pred_check_branch
        %120 = sbr.rel (%p117) target = $region12
      $region11: #{tpu_custom_call.1} parent=5 // pred_region
        %s121 = ssub.s32 %s15, 1
        // Predicated region
        $region13: #{tpu_custom_call.1} parent=11 // pred_check
          %p122 = pneg %p53
        $region14: #{tpu_custom_call.1} parent=11 // pred_check_branch
          %124 = sbr.rel (%p122) target = $region16
        $region15: #{tpu_custom_call.1} parent=11 // pred_region
          %s125 = smul.u32 6, %s25
          %127 = vsyncadd [#allocation3], 0
          %s128 = smul.addr %s125, 8
          %s129 = scalar_lea.hbm %s0, %s128
          %s130 = sshll.u32 %s129, 4
          %s131 = int_to_ptr.hbm [resolvable:$true] %s130
          %s132 = sshll.u32 [#allocation2], 4
          %s133 = int_to_ptr.vmem [resolvable:$true] %s132
          %138 = dma.hbm_to_vmem [thread:$0]  %s131, 768, %s133, [#allocation3], 128, 128, 8
        $region16: #{tpu_custom_call.1} parent=11 // pred_fallthru
          _
      $region12: #{tpu_custom_call.1} parent=5 // pred_fallthru
        _
      %p139 = scmp.lt.s32.totalorder %s15, 2
      // Predicated region
      $region17: #{tpu_custom_call.1} parent=5 // pred_check
        %p140 = pneg %p139
      $region18: #{tpu_custom_call.1} parent=5 // pred_check_branch
        %142 = sbr.rel (%p140) target = $region20
      $region19: #{tpu_custom_call.1} parent=5 // pred_region
        // Predicated region
        $region21: #{tpu_custom_call.1} parent=19 // pred_check
          %p143 = pneg %p73
        $region22: #{tpu_custom_call.1} parent=19 // pred_check_branch
          %145 = sbr.rel (%p143) target = $region24
        $region23: #{tpu_custom_call.1} parent=19 // pred_region
          %s146 = sand.u32 %s63, 1
          %s147 = scalar_lea.sflag [#allocation6], %s146
          %s148 = sand.u32 %s63, 1
          %s149 = smul.addr %s148, 128
          %s150 = scalar_lea.vmem [#allocation5], %s149
          %s151 = smul.u32 2, %s22
          %s152 = ssub.s32 3, %s151
          %p153 = scmp.lt.s32.totalorder %s152, 2
          %s154 = scalar_select %p153, %s152, 2
          %s155 = smul.u32 64, %s154
          %s156 = ssub.s32 128, %s155
          %s157 = sshll.u32 %s156, 4
          %158 = vsyncadd %s147, %s157
          %p159 = scmp.ne.s32.totalorder 0, %s155
          %s160 = smul.addr %s151, 8
          %s161 = scalar_lea.hbm %s1, %s160
          %s162 = smul.u32 %s154, 8
          %s163 = smul.u32 %s162, 8
          %s164 = sshll.u32 %s161, 4
          %s165 = int_to_ptr.hbm [resolvable:$true] %s164
          %s166 = sshll.u32 %s150, 4
          %s167 = int_to_ptr.vmem [resolvable:$true] %s166
          %s168 = sshll.u32 %s163, 4
          %172 = dma.hbm_to_vmem [thread:$0]  (%p159), %s165, %s168, %s167, %s147, 384, 256, %s162
        $region24: #{tpu_custom_call.1} parent=19 // pred_fallthru
          _
      $region20: #{tpu_custom_call.1} parent=5 // pred_fallthru
        _
      %p173 = scmp.le.s32.totalorder 1, %s15
      %p174 = scmp.lt.s32.totalorder %s15, 3
      %p175 = pnand %p173, %p174
      %p176 = pneg %p175
      // Predicated region
      $region25: #{tpu_custom_call.1} parent=5 // pred_check
        _
      $region26: #{tpu_custom_call.1} parent=5 // pred_check_branch
        %178 = sbr.rel (%p175) target = $region28
      $region27: #{tpu_custom_call.1} parent=5 // pred_region
        %s179 = ssub.s32 %s15, 1
        // Predicated region
        $region29: #{tpu_custom_call.1} parent=27 // pred_check
          %p180 = pneg %p53
        $region30: #{tpu_custom_call.1} parent=27 // pred_check_branch
          %182 = sbr.rel (%p180) target = $region32
        $region31: #{tpu_custom_call.1} parent=27 // pred_region
          %184 = dma.done [#allocation3], 768
        $region32: #{tpu_custom_call.1} parent=27 // pred_fallthru
          _
        %s185 = sand.u32 %s66, 1
        %s186 = scalar_lea.sflag [#allocation6], %s185
        %s187 = sand.u32 %s66, 1
        %s188 = smul.addr %s187, 128
        %s189 = scalar_lea.vmem [#allocation5], %s188
        // Predicated region
        $region33: #{tpu_custom_call.1} parent=27 // pred_check
          %p190 = pneg %p79
        $region34: #{tpu_custom_call.1} parent=27 // pred_check_branch
          %192 = sbr.rel (%p190) target = $region36
        $region35: #{tpu_custom_call.1} parent=27 // pred_region
          %194 = dma.done %s186, 2048
        $region36: #{tpu_custom_call.1} parent=27 // pred_fallthru
          _
        %p195 = pneg %p53
        %p196 = pneg %p50
        %s197 = sand.u32 %s66, 1
        %s198 = scalar_lea.sflag [#allocation6], %s197
        %s199 = sand.u32 %s66, 1
        %s200 = smul.addr %s199, 128
        %s201 = scalar_lea.vmem [#allocation5], %s200
        %p202 = pneg %p79
        %p203 = pneg %p76
        %p204 = pneg %p107
        %p205 = pneg %p104
        %s206 = sand.u32 %s94, 1
        %s207 = scalar_lea.sflag [#allocation4], %s206
        %s208 = sand.u32 %s94, 1
        %s209 = smul.addr %s208, 96
        %s210 = scalar_lea.vmem [#allocation7], %s209
        %s211 = smul.u32 6, %s25
        %s212 = smul.u32 2, %s24
        %s213 = ssub.s32 3, %s212
        %p214 = scmp.lt.s32.totalorder %s213, 2
        %s215 = scalar_select %p214, %s213, 2
        %s216 = smul.u32 64, %s215
        %s217 = smul.u32 6, %s25
        %s218 = smul.u32 2, %s24
        %s219 = ssub.s32 3, %s218
        %p220 = scmp.lt.s32.totalorder %s219, 2
        %s221 = scalar_select %p220, %s219, 2
        %s222 = smul.u32 48, %s221
        %v223 = vld [vmem:[#allocation2] sm:$0xff]
        %v224 = vld [vmem:[#allocation2 + $0x8] sm:$0xff]
        %v225 = vld [vmem:[#allocation2 + $0x10] sm:$0xff]
        %v226 = vld [vmem:[#allocation2 + $0x18] sm:$0xff]
        %v227 = vld [vmem:[#allocation2 + $0x20] sm:$0xff]
        %v228 = vld [vmem:[#allocation2 + $0x28] sm:$0xff]
        %v229 = vld [vmem:[%s189] sm:$0xff]
        %v230 = vld [vmem:[%s189 + $0x8] sm:$0xff]
        %v231 = vld [vmem:[%s189 + $0x10] sm:$0xff]
        %v232 = vld [vmem:[%s189 + $0x18] sm:$0xff]
        %v233 = vld [vmem:[%s189 + $0x20] sm:$0xff]
        %v234 = vld [vmem:[%s189 + $0x28] sm:$0xff]
        %v235 = vld [vmem:[%s189 + $0x30] sm:$0xff]
        %v236 = vld [vmem:[%s189 + $0x38] sm:$0xff]
        %v237 = vld [vmem:[%s189 + $0x40] sm:$0xff]
        %v238 = vld [vmem:[%s189 + $0x48] sm:$0xff]
        %v239 = vld [vmem:[%s189 + $0x50] sm:$0xff]
        %v240 = vld [vmem:[%s189 + $0x58] sm:$0xff]
        %v241 = vld [vmem:[%s189 + $0x60] sm:$0xff]
        %v242 = vld [vmem:[%s189 + $0x68] sm:$0xff]
        %v243 = vld [vmem:[%s189 + $0x70] sm:$0xff]
        %v244 = vld [vmem:[%s189 + $0x78] sm:$0xff]
        %vm245 = vcmask 523264
        %v247 = vsel %vm245, %v223, 0
        %v250 = vsel %vm245, %v224, 0
        %v253 = vsel %vm245, %v225, 0
        %v256 = vsel %vm245, %v226, 0
        %v259 = vsel %vm245, %v227, 0
        %v262 = vsel %vm245, %v228, 0
        %264 = vmatpush.msra.mxu0 0.0
        %265 = vmatpush.msra.mxu0 0.0
        %266 = vmatpush.msra.mxu0 0.0
        %267 = vmatpush.msra.mxu0 0.0
        %268 = vmatpush.msra.mxu0 0.0
        %269 = vmatpush.msra.mxu0 0.0
        %270 = vmatpush.msra.mxu0 0.0
        %271 = vmatpush.msra.mxu0 0.0
        %272 = vmatpush.msra.mxu0 %v243
        %273 = vmatpush.msra.mxu0 %v241
        %274 = vmatpush.msra.mxu0 %v239
        %275 = vmatpush.msra.mxu0 %v237
        %276 = vmatpush.msra.mxu0 %v235
        %277 = vmatpush.msra.mxu0 %v233
        %278 = vmatpush.msra.mxu0 %v231
        %279 = vmatpush.msra.mxu0 %v229
        %280 = vmatmul.f32.gmra.mxu0 %v247
        %v281 = vpop.f32.mrf.mxu0
        %v282 = vadd.f32 0.0, %v281
        %283 = vmatmul.f32.gmra.mxu0 %v250
        %v284 = vpop.f32.mrf.mxu0
        %v285 = vadd.f32 0.0, %v284
        %286 = vmatmul.f32.gmra.mxu0 %v253
        %v287 = vpop.f32.mrf.mxu0
        %v288 = vadd.f32 0.0, %v287
        %289 = vmatmul.f32.gmra.mxu0 %v256
        %v290 = vpop.f32.mrf.mxu0
        %v291 = vadd.f32 0.0, %v290
        %292 = vmatmul.f32.gmra.mxu0 %v259
        %v293 = vpop.f32.mrf.mxu0
        %v294 = vadd.f32 0.0, %v293
        %295 = vmatmul.f32.gmra.mxu0 %v262
        %v296 = vpop.f32.mrf.mxu0
        %v297 = vadd.f32 0.0, %v296
        %298 = vdwg.mxu0
        %299 = vmatpush.msra.mxu0 0.0
        %300 = vmatpush.msra.mxu0 0.0
        %301 = vmatpush.msra.mxu0 0.0
        %302 = vmatpush.msra.mxu0 0.0
        %303 = vmatpush.msra.mxu0 0.0
        %304 = vmatpush.msra.mxu0 0.0
        %305 = vmatpush.msra.mxu0 0.0
        %306 = vmatpush.msra.mxu0 0.0
        %307 = vmatpush.msra.mxu0 %v244
        %308 = vmatpush.msra.mxu0 %v242
        %309 = vmatpush.msra.mxu0 %v240
        %310 = vmatpush.msra.mxu0 %v238
        %311 = vmatpush.msra.mxu0 %v236
        %312 = vmatpush.msra.mxu0 %v234
        %313 = vmatpush.msra.mxu0 %v232
        %314 = vmatpush.msra.mxu0 %v230
        %315 = vmatmul.f32.gmra.mxu0 %v247
        %v316 = vpop.f32.mrf.mxu0
        %v317 = vadd.f32 0.0, %v316
        %318 = vmatmul.f32.gmra.mxu0 %v250
        %v319 = vpop.f32.mrf.mxu0
        %v320 = vadd.f32 0.0, %v319
        %321 = vmatmul.f32.gmra.mxu0 %v253
        %v322 = vpop.f32.mrf.mxu0
        %v323 = vadd.f32 0.0, %v322
        %324 = vmatmul.f32.gmra.mxu0 %v256
        %v325 = vpop.f32.mrf.mxu0
        %v326 = vadd.f32 0.0, %v325
        %327 = vmatmul.f32.gmra.mxu0 %v259
        %v328 = vpop.f32.mrf.mxu0
        %v329 = vadd.f32 0.0, %v328
        %330 = vmatmul.f32.gmra.mxu0 %v262
        %v331 = vpop.f32.mrf.mxu0
        %v332 = vadd.f32 0.0, %v331
        %333 = vdwg.mxu0
        %334 = vst [vmem:[%s210] sm:$0xff] %v282
        %335 = vst [vmem:[%s210 + $0x8] sm:$0xff] %v317
        %336 = vst [vmem:[%s210 + $0x10] sm:$0xff] %v285
        %337 = vst [vmem:[%s210 + $0x18] sm:$0xff] %v320
        %338 = vst [vmem:[%s210 + $0x20] sm:$0xff] %v288
        %339 = vst [vmem:[%s210 + $0x28] sm:$0xff] %v323
        %340 = vst [vmem:[%s210 + $0x30] sm:$0xff] %v291
        %341 = vst [vmem:[%s210 + $0x38] sm:$0xff] %v326
        %342 = vst [vmem:[%s210 + $0x40] sm:$0xff] %v294
        %343 = vst [vmem:[%s210 + $0x48] sm:$0xff] %v329
        %344 = vst [vmem:[%s210 + $0x50] sm:$0xff] %v297
        %345 = vst [vmem:[%s210 + $0x58] sm:$0xff] %v332
        %s346 = sand.u32 %s94, 1
        %s347 = scalar_lea.sflag [#allocation4], %s346
        %s348 = sand.u32 %s94, 1
        %s349 = smul.addr %s348, 96
        %s350 = scalar_lea.vmem [#allocation7], %s349
        // Predicated region
        $region37: #{tpu_custom_call.1} parent=27 // pred_check
          %p351 = pneg %p104
        $region38: #{tpu_custom_call.1} parent=27 // pred_check_branch
          %353 = sbr.rel (%p351) target = $region40
        $region39: #{tpu_custom_call.1} parent=27 // pred_region
          %s354 = smul.u32 6, %s25
          %s355 = smul.u32 2, %s24
          %s356 = ssub.s32 3, %s355
          %p357 = scmp.lt.s32.totalorder %s356, 2
          %s358 = scalar_select %p357, %s356, 2
          %s359 = smul.u32 48, %s358
          %s360 = ssub.s32 96, %s359
          %s361 = sshll.u32 %s360, 4
          %362 = vsyncadd %s347, %s361
          %p363 = scmp.ne.s32.totalorder 0, %s359
          %s364 = smul.addr %s354, 3
          %s365 = sadd.s32 %s355, %s364
          %s366 = smul.addr %s365, 8
          %s367 = scalar_lea.hbm %s2, %s366
          %s368 = smul.u32 %s358, 8
          %s369 = smul.u32 %s368, 6
          %s370 = sshll.u32 %s350, 4
          %s371 = int_to_ptr.vmem [resolvable:$true] %s370
          %s372 = sshll.u32 %s367, 4
          %s373 = int_to_ptr.hbm [resolvable:$true] %s372
          %s374 = sshll.u32 %s369, 4
          %378 = dma.vmem_to_hbm [thread:$0]  (%p363), %s371, %s374, %s373, %s347, 256, 384, %s368
        $region40: #{tpu_custom_call.1} parent=27 // pred_fallthru
          _
      $region28: #{tpu_custom_call.1} parent=5 // pred_fallthru
        _
      %p379 = scmp.le.s32.totalorder 2, %s15
      // Predicated region
      $region41: #{tpu_custom_call.1} parent=5 // pred_check
        %p380 = pneg %p379
      $region42: #{tpu_custom_call.1} parent=5 // pred_check_branch
        %382 = sbr.rel (%p380) target = $region44
      $region43: #{tpu_custom_call.1} parent=5 // pred_region
        %s383 = ssub.s32 %s15, 2
        // Predicated region
        $region45: #{tpu_custom_call.1} parent=43 // pred_check
          %p384 = pneg %p110
        $region46: #{tpu_custom_call.1} parent=43 // pred_check_branch
          %386 = sbr.rel (%p384) target = $region48
        $region47: #{tpu_custom_call.1} parent=43 // pred_region
          %s387 = sand.u32 %s95, 1
          %s388 = scalar_lea.sflag [#allocation4], %s387
          %s389 = sand.u32 %s95, 1
          %s390 = smul.addr %s389, 96
          %s391 = scalar_lea.vmem [#allocation7], %s390
          %393 = dma.done %s388, 1536
        $region48: #{tpu_custom_call.1} parent=43 // pred_fallthru
          _
      $region44: #{tpu_custom_call.1} parent=5 // pred_fallthru
        _
    $region6: #{tpu_custom_call.1} parent=1 // loop_footer
      %s19 = sadd.s32 1, %s15
    $region7: #{tpu_custom_call.1} parent=1 // loop_footer_branch
      %14 = sbr.rel target = $region3
    $region8: #{tpu_custom_call.1} parent=1 // loop_exit
      _
    %394 = vsyncpa [#allocation3], 1
    %s395 = scalar_lea.sflag [#allocation3], 1
    %396 = vsyncpa %s395, 1
    %397 = vsyncpa [#allocation6], 1
    %s398 = scalar_lea.sflag [#allocation6], 1
    %399 = vsyncpa %s398, 1
    %400 = vsyncpa [#allocation4], 1
    %s401 = scalar_lea.sflag [#allocation4], 1
    %402 = vsyncpa %s401, 1

</llo_original>
